<compile_context>
chip_gen: v7x
topology: tpu7x:2x2x1
jax: 0.10.0
libtpu: 0.0.40
codegen_flags: <defaults>
</compile_context>

<pallas_src>
import jax
import jax.numpy as jnp
from jax.experimental import pallas as pl
from jax.experimental.pallas import tpu as pltpu

HIDDEN = 20        # hidden_neurons in SEIRDNet
NUM_LAYERS = 4     # number of (Linear -> Tanh) blocks
OUT_DIM = 5        # SEIRD outputs
TB = 512           # batch (lane) tile: multiple of 256
MIN_TILES = 2      # keep >= 2 grid steps so v7x's second TensorCore gets work


def _seird_mlp_kernel(t_ref, wb_ref, wh_ref, wo_ref, o_ref):
    """Fused (Linear->Tanh) x4 -> Linear, feature-on-sublane layout.

    t_ref : (1, TB)                time points, batch on lanes
    wb_ref: (HIDDEN, 6)            columns = [W1, b1, b2, b3, b4, b5(padded)]
    wh_ref: (3, HIDDEN, HIDDEN)    W2, W3, W4  (PyTorch (out, in) orientation)
    wo_ref: (OUT_DIM, HIDDEN)      W5
    o_ref : (OUT_DIM, TB)
    """
    t = t_ref[...]                                     # (1, TB)
    wb = wb_ref[...]                                   # (20, 6) small param slab

    # Layer 1: K=1 "matmul" done on the VPU as a broadcast outer product.
    w1 = wb[:, 0:1]                                    # (20, 1)
    b1 = wb[:, 1:2]                                    # (20, 1)
    h = jnp.tanh(w1 * t + b1)                          # (20, TB)

    # Layers 2-4: 20x20 matmuls on the MXU, N = TB lanes.
    for l in range(NUM_LAYERS - 1):
        w = wh_ref[l]                                  # (20, 20)
        b = wb[:, 2 + l:3 + l]                         # (20, 1)
        h = jnp.tanh(
            jnp.dot(w, h, preferred_element_type=jnp.float32) + b)

    # Output layer (no activation).
    bo = wb[:OUT_DIM, 5:6]                             # (5, 1)
    o_ref[...] = (
        jnp.dot(wo_ref[...], h, preferred_element_type=jnp.float32) + bo)


def init_seird_params(key, num_layers=NUM_LAYERS, hidden=HIDDEN):
    """Xavier-uniform (tanh gain = 5/3) weights in (out, in) layout; biases 0.001."""
    gain = 5.0 / 3.0
    dims = [1] + [hidden] * num_layers + [OUT_DIM]
    params = []
    for fan_in, fan_out in zip(dims[:-1], dims[1:]):
        key, sub = jax.random.split(key)
        bound = gain * jnp.sqrt(6.0 / (fan_in + fan_out))
        w = jax.random.uniform(sub, (fan_out, fan_in), jnp.float32,
                               minval=-bound, maxval=bound)
        b = jnp.full((fan_out,), 0.001, jnp.float32)
        params.append((w, b))
    return params


def _pack_params(params):
    """Consolidate the 10 tiny tensors into 3 kernel inputs."""
    (w1, b1), (w2, b2), (w3, b3), (w4, b4), (w5, b5) = params
    b5p = jnp.zeros((HIDDEN,), jnp.float32).at[:OUT_DIM].set(b5)
    wb = jnp.stack([w1[:, 0], b1, b2, b3, b4, b5p], axis=1)    # (20, 6)
    wh = jnp.stack([w2, w3, w4], axis=0)                       # (3, 20, 20)
    wo = w5                                                    # (5, 20)
    return wb, wh, wo


def seird_forward(t, params):
    """t: (n, 1) float32 -> (n, 5) float32 (matches PyTorch SEIRDNet.forward)."""
    n, in_dim = t.shape
    assert in_dim == 1
    wb, wh, wo = _pack_params(params)

    n_tiles = max(MIN_TILES, pl.cdiv(n, TB))
    n_pad = n_tiles * TB

    # Lane-major input: batch on the last (lane) axis, zero-padded to n_pad.
    t_lane = jnp.zeros((1, n_pad), jnp.float32).at[0, :n].set(t[:, 0])

    grid_spec = pltpu.PrefetchScalarGridSpec(
        num_scalar_prefetch=0,
        grid=(n_tiles,),
        in_specs=[
            pl.BlockSpec((1, TB), lambda i: (0, i)),           # t batch tile
            pl.BlockSpec(wb.shape, lambda i: (0, 0)),          # W1 + all biases
            pl.BlockSpec(wh.shape, lambda i: (0, 0, 0)),       # W2..W4 stack
            pl.BlockSpec(wo.shape, lambda i: (0, 0)),          # W5
        ],
        out_specs=pl.BlockSpec((OUT_DIM, TB), lambda i: (0, i)),
    )

    out = pl.pallas_call(
        _seird_mlp_kernel,
        out_shape=jax.ShapeDtypeStruct((OUT_DIM, n_pad), jnp.float32),
        grid_spec=grid_spec,
        compiler_params=pltpu.CompilerParams(
            dimension_semantics=("parallel",)),
    )(t_lane, wb, wh, wo)

    # Drop batch padding and return in PyTorch (n, 5) orientation.
    return out[:, :n].T


def seird_forward_ref(t, params):
    """Pure-JAX reference (PyTorch semantics: h @ W.T + b)."""
    h = t
    for i, (w, b) in enumerate(params):
        h = h @ w.T + b
        if i < len(params) - 1:
            h = jnp.tanh(h)
    return h


if __name__ == "__main__":
    key = jax.random.PRNGKey(0)
    pkey, tkey = jax.random.split(key)

    params = init_seird_params(pkey)

    n = 8  # small demo batch; wrapper pads to >= 2 tiles of TB internally
    t = jax.random.uniform(tkey, (n, 1), jnp.float32)  # time points in [0, 1)

    out = seird_forward(t, params)
    out = jax.block_until_ready(out)

    ref = seird_forward_ref(t, params)
    assert out.shape == (n, OUT_DIM)
    assert jnp.allclose(out, ref, atol=1e-4, rtol=1e-4), "mismatch vs reference"

    print("KERNEL_OK")
</pallas_src>

<mosaic_0001>
module attributes {stable_mosaic.version = 11 : i64} {
  func.func @_seird_mlp_kernel(%arg0: i32, %arg1: memref<1x512xf32, #tpu.memory_space<vmem>>, %arg2: memref<20x6xf32, #tpu.memory_space<vmem>>, %arg3: memref<3x20x20xf32, #tpu.memory_space<vmem>>, %arg4: memref<5x20xf32, #tpu.memory_space<vmem>>, %arg5: memref<5x512xf32, #tpu.memory_space<vmem>>) attributes {dimension_semantics = [#tpu.dimension_semantics<parallel>], iteration_bounds = array<i64: 2>, scalar_prefetch = 0 : i64, scratch_operands = 0 : i64, tpu.core_type = #tpu.core_type<tc>, window_params = [{transform_indices = @transform_0, window_bounds = array<i64: 1, 512>}, {pipeline_mode = #tpu.pipeline_mode<synchronous>, transform_indices = @transform_1, window_bounds = array<i64: 20, 6>}, {pipeline_mode = #tpu.pipeline_mode<synchronous>, transform_indices = @transform_2, window_bounds = array<i64: 3, 20, 20>}, {pipeline_mode = #tpu.pipeline_mode<synchronous>, transform_indices = @transform_3, window_bounds = array<i64: 5, 20>}, {transform_indices = @transform_4, window_bounds = array<i64: 5, 512>}]} {
    %c0 = arith.constant 0 : index
    %c0_0 = arith.constant 0 : index
    %0 = vector.load %arg1[%c0, %c0_0] : memref<1x512xf32, #tpu.memory_space<vmem>>, vector<1x512xf32>
    %c0_1 = arith.constant 0 : index
    %c0_2 = arith.constant 0 : index
    %1 = vector.load %arg2[%c0_1, %c0_2] : memref<20x6xf32, #tpu.memory_space<vmem>>, vector<20x6xf32>
    %2 = vector.extract_strided_slice %1 {offsets = [0, 0], sizes = [20, 1], strides = [1, 1]} : vector<20x6xf32> to vector<20x1xf32>
    %3 = vector.extract_strided_slice %1 {offsets = [0, 1], sizes = [20, 1], strides = [1, 1]} : vector<20x6xf32> to vector<20x1xf32>
    %4 = vector.broadcast %2 : vector<20x1xf32> to vector<20x512xf32>
    %5 = vector.broadcast %0 : vector<1x512xf32> to vector<20x512xf32>
    %6 = arith.mulf %4, %5 : vector<20x512xf32>
    %7 = vector.broadcast %3 : vector<20x1xf32> to vector<20x512xf32>
    %8 = arith.addf %6, %7 : vector<20x512xf32>
    %9 = math.tanh %8 : vector<20x512xf32>
    %c0_3 = arith.constant 0 : index
    %c0_4 = arith.constant 0 : index
    %c0_5 = arith.constant 0 : index
    %10 = vector.load %arg3[%c0_3, %c0_4, %c0_5] : memref<3x20x20xf32, #tpu.memory_space<vmem>>, vector<1x20x20xf32>
    %11 = vector.shape_cast %10 : vector<1x20x20xf32> to vector<20x20xf32>
    %12 = vector.extract_strided_slice %1 {offsets = [0, 2], sizes = [20, 1], strides = [1, 1]} : vector<20x6xf32> to vector<20x1xf32>
    %cst = arith.constant dense<0.000000e+00> : vector<20x512xf32>
    %13 = tpu.matmul %11, %9, %cst {dimension_numbers = #tpu.dot_dimension_numbers<[1], [0], [0], [1], [0, 0, 1, 1], [], []>} : vector<20x20xf32>, vector<20x512xf32>, vector<20x512xf32> -> vector<20x512xf32>
    %14 = vector.broadcast %12 : vector<20x1xf32> to vector<20x512xf32>
    %15 = arith.addf %13, %14 : vector<20x512xf32>
    %16 = math.tanh %15 : vector<20x512xf32>
    %c1 = arith.constant 1 : index
    %c0_6 = arith.constant 0 : index
    %c0_7 = arith.constant 0 : index
    %17 = vector.load %arg3[%c1, %c0_6, %c0_7] : memref<3x20x20xf32, #tpu.memory_space<vmem>>, vector<1x20x20xf32>
    %18 = vector.shape_cast %17 : vector<1x20x20xf32> to vector<20x20xf32>
    %19 = vector.extract_strided_slice %1 {offsets = [0, 3], sizes = [20, 1], strides = [1, 1]} : vector<20x6xf32> to vector<20x1xf32>
    %cst_8 = arith.constant dense<0.000000e+00> : vector<20x512xf32>
    %20 = tpu.matmul %18, %16, %cst_8 {dimension_numbers = #tpu.dot_dimension_numbers<[1], [0], [0], [1], [0, 0, 1, 1], [], []>} : vector<20x20xf32>, vector<20x512xf32>, vector<20x512xf32> -> vector<20x512xf32>
    %21 = vector.broadcast %19 : vector<20x1xf32> to vector<20x512xf32>
    %22 = arith.addf %20, %21 : vector<20x512xf32>
    %23 = math.tanh %22 : vector<20x512xf32>
    %c2 = arith.constant 2 : index
    %c0_9 = arith.constant 0 : index
    %c0_10 = arith.constant 0 : index
    %24 = vector.load %arg3[%c2, %c0_9, %c0_10] : memref<3x20x20xf32, #tpu.memory_space<vmem>>, vector<1x20x20xf32>
    %25 = vector.shape_cast %24 : vector<1x20x20xf32> to vector<20x20xf32>
    %26 = vector.extract_strided_slice %1 {offsets = [0, 4], sizes = [20, 1], strides = [1, 1]} : vector<20x6xf32> to vector<20x1xf32>
    %cst_11 = arith.constant dense<0.000000e+00> : vector<20x512xf32>
    %27 = tpu.matmul %25, %23, %cst_11 {dimension_numbers = #tpu.dot_dimension_numbers<[1], [0], [0], [1], [0, 0, 1, 1], [], []>} : vector<20x20xf32>, vector<20x512xf32>, vector<20x512xf32> -> vector<20x512xf32>
    %28 = vector.broadcast %26 : vector<20x1xf32> to vector<20x512xf32>
    %29 = arith.addf %27, %28 : vector<20x512xf32>
    %30 = math.tanh %29 : vector<20x512xf32>
    %31 = vector.extract_strided_slice %1 {offsets = [0, 5], sizes = [5, 1], strides = [1, 1]} : vector<20x6xf32> to vector<5x1xf32>
    %c0_12 = arith.constant 0 : index
    %c0_13 = arith.constant 0 : index
    %32 = vector.load %arg4[%c0_12, %c0_13] : memref<5x20xf32, #tpu.memory_space<vmem>>, vector<5x20xf32>
    %cst_14 = arith.constant dense<0.000000e+00> : vector<5x512xf32>
    %33 = tpu.matmul %32, %30, %cst_14 {dimension_numbers = #tpu.dot_dimension_numbers<[1], [0], [0], [1], [0, 0, 1, 1], [], []>} : vector<5x20xf32>, vector<20x512xf32>, vector<5x512xf32> -> vector<5x512xf32>
    %34 = vector.broadcast %31 : vector<5x1xf32> to vector<5x512xf32>
    %35 = arith.addf %33, %34 : vector<5x512xf32>
    %c0_15 = arith.constant 0 : index
    %c0_16 = arith.constant 0 : index
    %36 = vector.load %arg5[%c0_15, %c0_16] : memref<5x512xf32, #tpu.memory_space<vmem>>, vector<5x512xf32>
    tpu.vector_store %arg5[%c0_15, %c0_16], %35 {strides = array<i32>} : memref<5x512xf32, #tpu.memory_space<vmem>>, vector<5x512xf32>,
    return
  }
  func.func @transform_0(%arg0: i32) -> (i32, i32) {
    %c0_i32 = arith.constant 0 : i32
    %c0_i32_0 = arith.constant 0 : i32
    return %c0_i32, %arg0 : i32, i32
  }
  func.func @transform_1(%arg0: i32) -> (i32, i32) {
    %c0_i32 = arith.constant 0 : i32
    %c0_i32_0 = arith.constant 0 : i32
    %c0_i32_1 = arith.constant 0 : i32
    return %c0_i32, %c0_i32_0 : i32, i32
  }
  func.func @transform_2(%arg0: i32) -> (i32, i32, i32) {
    %c0_i32 = arith.constant 0 : i32
    %c0_i32_0 = arith.constant 0 : i32
    %c0_i32_1 = arith.constant 0 : i32
    %c0_i32_2 = arith.constant 0 : i32
    return %c0_i32, %c0_i32_0, %c0_i32_1 : i32, i32, i32
  }
  func.func @transform_3(%arg0: i32) -> (i32, i32) {
    %c0_i32 = arith.constant 0 : i32
    %c0_i32_0 = arith.constant 0 : i32
    %c0_i32_1 = arith.constant 0 : i32
    return %c0_i32, %c0_i32_0 : i32, i32
  }
  func.func @transform_4(%arg0: i32) -> (i32, i32) {
    %c0_i32 = arith.constant 0 : i32
    %c0_i32_0 = arith.constant 0 : i32
    return %c0_i32, %arg0 : i32, i32
  }
}

</mosaic_0001>

<llo_original>
// kernel: tpu_custom_call.1
$region0: #{tpu_custom_call.1}
  #allocation0 [shape = 'u32[]', space=smem, size = 0x4, offset = 0x4, fixed_abs, tag = 'smem constant byte address 0x4 - core index']
  #allocation1 [shape = 'u32[144,128]{1,0:T(1,128)}', space=vmem, size = 0x12000, scoped, tag = 'internal scratch']
  %s0 = inlined_call_operand.vmem [shape: f32[1,1024], index: 0, kind: input, shape index: {}]
  %s1 = inlined_call_operand.vmem [shape: f32[20,6], index: 1, kind: input, shape index: {}]
  %s2 = inlined_call_operand.hbm [shape: f32[3,20,20], index: 2, kind: input, shape index: {}]
  %s3 = inlined_call_operand.vmem [shape: f32[5,20], index: 3, kind: input, shape index: {}]
  %s4 = inlined_call_operand.hbm [shape: f32[5,1024], index: 4, kind: output, shape index: {}]
  %s5 = sld [smem:[#allocation0]]
  $region53: #{tpu_custom_call.1} parent=0
    _
  %s7 = ssub.s32 1, %s5
  %s8 = scalar_select 0, %s7, %s5
  $region1: #{tpu_custom_call.1} parent=0
    #allocation2 [shape = 'u8[36864]{0}', space=vmem, size = 0x9000, scoped, tag = 'input window, operand 2, single buffered']
    #allocation3 [shape = 's32[2]{0}', space=sflag, size = 0x8, scoped, tag = 'scoped memory for tpu_custom_call.1']
    #allocation4 [shape = 's32[2]{0}', space=sflag, size = 0x8, scoped, tag = 'scoped memory for tpu_custom_call.1']
    #allocation5 [shape = 'u8[32768]{0}', space=vmem, size = 0x8000, scoped, tag = 'output window, operand 0']
    %9 = vsyncpa [#allocation3], 0
    %10 = vsyncpa [#allocation4], 0
    %s11 = scalar_lea.sflag [#allocation4], 1
    %12 = vsyncpa %s11, 0
    loop: start=0, step=1, limit=4
    $region2: #{tpu_custom_call.1} parent=1 // loop_pre_header
      _
    $region3: #{tpu_custom_call.1} parent=1 // loop_header
      %s14 = sphi 0, %s18
      %p15 = scmp.ge.s32.totalorder %s14, 4
      %s24 = sphi 0, %s26
      %s27 = sphi 0, %s24
      %s28 = sphi 0, %s27
      %s44 = sphi 0, %s28
      %s48 = sphi 0, %s48
      %s50 = sphi 0, %s48
      %s51 = sphi 0, %s50
      %s65 = sphi 0, %s51
      %s69 = sphi 0, %s69
      %s71 = sphi 0, %s69
      %s72 = sphi 0, %s71
      %s86 = sphi 0, %s72
      %s90 = sphi 0, %s90
      %s92 = sphi 0, %s90
      %s93 = sphi 0, %s92
      %s107 = sphi 0, %s93
      %s113 = sphi 0, %s115
      %s116 = sphi 0, %s113
      %s117 = sphi 0, %s116
      %s133 = sphi 0, %s117
    $region4: #{tpu_custom_call.1} parent=1 // loop_header_branch
      %17 = sbr.rel (%p15) target = $region8
    $region5: #{tpu_custom_call.1} parent=1 // loop_body
      %s19 = ssub.s32 %s14, 1
      %s20 = ssub.s32 %s14, 2
      %s21 = sadd.s32 %s14, 1
      %s22 = ssub.s32 %s14, %s21
      %p23 = scmp.eq.s32.totalorder %s22, 0
      %s25 = sadd.s32 %s24, 1
      %s26 = scalar_select %p23, %s24, %s25
      %p29 = pneg %p23
      %p30 = scmp.eq.s32.totalorder %s14, 1
      %p31 = por %p29, %p30
      %p32 = scmp.ne.s32.totalorder %s24, %s27
      %p33 = scmp.eq.s32.totalorder %s14, 0
      %p34 = por %p32, %p33
      %p35 = scmp.ne.s32.totalorder %s24, %s27
      %p36 = scmp.eq.s32.totalorder %s19, 1
      %p37 = por %p35, %p36
      %p38 = scmp.ne.s32.totalorder %s27, %s28
      %p39 = scmp.eq.s32.totalorder %s19, 0
      %p40 = por %p38, %p39
      %p41 = scmp.ne.s32.totalorder %s27, %s28
      %p42 = scmp.eq.s32.totalorder %s20, 1
      %p43 = por %p41, %p42
      %p45 = scmp.ne.s32.totalorder %s28, %s44
      %p46 = scmp.eq.s32.totalorder %s20, 0
      %p47 = por %p45, %p46
      %s49 = sadd.s32 %s48, 1
      %p52 = scmp.eq.s32.totalorder %s14, 1
      %p53 = scmp.ne.s32.totalorder %s48, %s50
      %p54 = scmp.eq.s32.totalorder %s14, 0
      %p55 = por %p53, %p54
      %p56 = scmp.ne.s32.totalorder %s48, %s50
      %p57 = scmp.eq.s32.totalorder %s19, 1
      %p58 = por %p56, %p57
      %p59 = scmp.ne.s32.totalorder %s50, %s51
      %p60 = scmp.eq.s32.totalorder %s19, 0
      %p61 = por %p59, %p60
      %p62 = scmp.ne.s32.totalorder %s50, %s51
      %p63 = scmp.eq.s32.totalorder %s20, 1
      %p64 = por %p62, %p63
      %p66 = scmp.ne.s32.totalorder %s51, %s65
      %p67 = scmp.eq.s32.totalorder %s20, 0
      %p68 = por %p66, %p67
      %s70 = sadd.s32 %s69, 1
      %p73 = scmp.eq.s32.totalorder %s14, 1
      %p74 = scmp.ne.s32.totalorder %s69, %s71
      %p75 = scmp.eq.s32.totalorder %s14, 0
      %p76 = por %p74, %p75
      %p77 = scmp.ne.s32.totalorder %s69, %s71
      %p78 = scmp.eq.s32.totalorder %s19, 1
      %p79 = por %p77, %p78
      %p80 = scmp.ne.s32.totalorder %s71, %s72
      %p81 = scmp.eq.s32.totalorder %s19, 0
      %p82 = por %p80, %p81
      %p83 = scmp.ne.s32.totalorder %s71, %s72
      %p84 = scmp.eq.s32.totalorder %s20, 1
      %p85 = por %p83, %p84
      %p87 = scmp.ne.s32.totalorder %s72, %s86
      %p88 = scmp.eq.s32.totalorder %s20, 0
      %p89 = por %p87, %p88
      %s91 = sadd.s32 %s90, 1
      %p94 = scmp.eq.s32.totalorder %s14, 1
      %p95 = scmp.ne.s32.totalorder %s90, %s92
      %p96 = scmp.eq.s32.totalorder %s14, 0
      %p97 = por %p95, %p96
      %p98 = scmp.ne.s32.totalorder %s90, %s92
      %p99 = scmp.eq.s32.totalorder %s19, 1
      %p100 = por %p98, %p99
      %p101 = scmp.ne.s32.totalorder %s92, %s93
      %p102 = scmp.eq.s32.totalorder %s19, 0
      %p103 = por %p101, %p102
      %p104 = scmp.ne.s32.totalorder %s92, %s93
      %p105 = scmp.eq.s32.totalorder %s20, 1
      %p106 = por %p104, %p105
      %p108 = scmp.ne.s32.totalorder %s93, %s107
      %p109 = scmp.eq.s32.totalorder %s20, 0
      %p110 = por %p108, %p109
      %s111 = ssub.s32 %s14, %s21
      %p112 = scmp.eq.s32.totalorder %s111, 0
      %s114 = sadd.s32 %s113, 1
      %s115 = scalar_select %p112, %s113, %s114
      %p118 = pneg %p112
      %p119 = scmp.eq.s32.totalorder %s14, 1
      %p120 = por %p118, %p119
      %p121 = scmp.ne.s32.totalorder %s113, %s116
      %p122 = scmp.eq.s32.totalorder %s14, 0
      %p123 = por %p121, %p122
      %p124 = scmp.ne.s32.totalorder %s113, %s116
      %p125 = scmp.eq.s32.totalorder %s19, 1
      %p126 = por %p124, %p125
      %p127 = scmp.ne.s32.totalorder %s116, %s117
      %p128 = scmp.eq.s32.totalorder %s19, 0
      %p129 = por %p127, %p128
      %p130 = scmp.ne.s32.totalorder %s116, %s117
      %p131 = scmp.eq.s32.totalorder %s20, 1
      %p132 = por %p130, %p131
      %p134 = scmp.ne.s32.totalorder %s117, %s133
      %p135 = scmp.eq.s32.totalorder %s20, 0
      %p136 = por %p134, %p135
      %p137 = scmp.le.s32.totalorder 1, %s14
      %p138 = scmp.lt.s32.totalorder %s14, 3
      %p139 = pnand %p137, %p138
      %p140 = pneg %p139
      // Predicated region
      $region9: #{tpu_custom_call.1} parent=5 // pred_check
        _
      $region10: #{tpu_custom_call.1} parent=5 // pred_check_branch
        %142 = sbr.rel (%p139) target = $region12
      $region11: #{tpu_custom_call.1} parent=5 // pred_region
        %s143 = ssub.s32 %s14, 1
        // Predicated region
        $region13: #{tpu_custom_call.1} parent=11 // pred_check
          %p144 = pneg %p61
        $region14: #{tpu_custom_call.1} parent=11 // pred_check_branch
          %146 = sbr.rel (%p144) target = $region16
        $region15: #{tpu_custom_call.1} parent=11 // pred_region
          _
        $region16: #{tpu_custom_call.1} parent=11 // pred_fallthru
          _
        // Predicated region
        $region17: #{tpu_custom_call.1} parent=11 // pred_check
          %p147 = pneg %p82
        $region18: #{tpu_custom_call.1} parent=11 // pred_check_branch
          %149 = sbr.rel (%p147) target = $region20
        $region19: #{tpu_custom_call.1} parent=11 // pred_region
          %s151 = ssub.s32 1152, 1152
          %152 = vsyncadd [#allocation3], %s151
          %s153 = sshll.u32 [#allocation2], 4
          %s154 = int_to_ptr.vmem [resolvable:$true] %s153
          %159 = dma.hbm_to_vmem [thread:$0]  %s2, 1152, %s154, [#allocation3], 128, 128, 8
        $region20: #{tpu_custom_call.1} parent=11 // pred_fallthru
          _
        // Predicated region
        $region21: #{tpu_custom_call.1} parent=11 // pred_check
          %p160 = pneg %p103
        $region22: #{tpu_custom_call.1} parent=11 // pred_check_branch
          %162 = sbr.rel (%p160) target = $region24
        $region23: #{tpu_custom_call.1} parent=11 // pred_region
          _
        $region24: #{tpu_custom_call.1} parent=11 // pred_fallthru
          _
      $region12: #{tpu_custom_call.1} parent=5 // pred_fallthru
        _
      %p163 = scmp.lt.s32.totalorder %s14, 2
      // Predicated region
      $region25: #{tpu_custom_call.1} parent=5 // pred_check
        %p164 = pneg %p163
      $region26: #{tpu_custom_call.1} parent=5 // pred_check_branch
        %166 = sbr.rel (%p164) target = $region28
      $region27: #{tpu_custom_call.1} parent=5 // pred_region
        // Predicated region
        $region29: #{tpu_custom_call.1} parent=27 // pred_check
          %p167 = pneg %p34
        $region30: #{tpu_custom_call.1} parent=27 // pred_check_branch
          %169 = sbr.rel (%p167) target = $region32
        $region31: #{tpu_custom_call.1} parent=27 // pred_region
          %s170 = smul.u32 4, %s14
          %p171 = scmp.lt.s32.totalorder %s170, 7
          %s172 = scalar_select %p171, %s170, 7
          %s173 = scalar_lea.vmem %s0, %s172
          %s174 = smul.u32 4, %s14
        $region32: #{tpu_custom_call.1} parent=27 // pred_fallthru
          _
      $region28: #{tpu_custom_call.1} parent=5 // pred_fallthru
        _
      %p175 = scmp.le.s32.totalorder 1, %s14
      %p176 = scmp.lt.s32.totalorder %s14, 3
      %p177 = pnand %p175, %p176
      %p178 = pneg %p177
      // Predicated region
      $region33: #{tpu_custom_call.1} parent=5 // pred_check
        _
      $region34: #{tpu_custom_call.1} parent=5 // pred_check_branch
        %180 = sbr.rel (%p177) target = $region36
      $region35: #{tpu_custom_call.1} parent=5 // pred_region
        %s181 = ssub.s32 %s14, 1
        // Predicated region
        $region37: #{tpu_custom_call.1} parent=35 // pred_check
          %p182 = pneg %p82
        $region38: #{tpu_custom_call.1} parent=35 // pred_check_branch
          %184 = sbr.rel (%p182) target = $region40
        $region39: #{tpu_custom_call.1} parent=35 // pred_region
          %185 = dma.done [#allocation3], 1152
        $region40: #{tpu_custom_call.1} parent=35 // pred_fallthru
          _
        %s186 = smul.u32 4, %s19
        %p187 = scmp.lt.s32.totalorder %s186, 7
        %s188 = scalar_select %p187, %s186, 7
        %s189 = scalar_lea.vmem %s0, %s188
        %p190 = pneg %p40
        %p191 = pneg %p37
        %p192 = pneg %p61
        %p193 = pneg %p58
        %p194 = pneg %p82
        %p195 = pneg %p79
        %p196 = pneg %p103
        %p197 = pneg %p100
        %p198 = pneg %p129
        %p199 = pneg %p126
        %s200 = sand.u32 %s116, 1
        %s201 = scalar_lea.sflag [#allocation4], %s200
        %s202 = sand.u32 %s116, 1
        %s203 = smul.addr %s202, 32
        %s204 = scalar_lea.vmem [#allocation5], %s203
        %s205 = smul.u32 4, %s19
        %p206 = scmp.lt.s32.totalorder %s205, 7
        %s207 = scalar_select %p206, %s205, 7
        %s208 = scalar_lea.vmem %s0, %s207
        %s209 = smul.u32 4, %s19
        %s210 = smul.u32 4, %s19
        %v211 = vld [vmem:[%s208] sm:$0xf]
        %v212 = vld [vmem:[%s1] sm:$0xff]
        %v213 = vld [vmem:[%s1 + $0x8] sm:$0xff]
        %v214 = vld [vmem:[%s1 + $0x10] sm:$0xf]
        %216 = vset.pattern.permute.xlu0 0
        %217 = vperm.xlu0 %216, %v212
        %v218 = vpop.permute.xlu0 %217
        %221 = vset.pattern.permute.xlu0 0
        %222 = vperm.xlu0 %221, %v213
        %v223 = vpop.permute.xlu0 %222
        %226 = vset.pattern.permute.xlu0 0
        %227 = vperm.xlu0 %226, %v214
        %v228 = vpop.permute.xlu0 %227
        %v231 = vlaneseq
        %v232 = vshrl.u32 %v231, 7
        %v233 = vsub.s32 0, %v232
        %v234 = vrot.slane %v211, %v233
        %v235 = vlaneseq
        %v236 = vshrl.u32 %v235, 7
        %v237 = vsub.s32 1, %v236
        %v238 = vrot.slane %v211, %v237
        %v239 = vlaneseq
        %v240 = vshrl.u32 %v239, 7
        %v241 = vsub.s32 2, %v240
        %v242 = vrot.slane %v211, %v241
        %v243 = vlaneseq
        %v244 = vshrl.u32 %v243, 7
        %v245 = vsub.s32 3, %v244
        %v246 = vrot.slane %v211, %v245
        %v251 = vmul.f32 %v218, %v234
        %v252 = vmul.f32 %v218, %v238
        %v253 = vmul.f32 %v218, %v242
        %v254 = vmul.f32 %v218, %v246
        %v255 = vmul.f32 %v223, %v234
        %v256 = vmul.f32 %v223, %v238
        %v257 = vmul.f32 %v223, %v242
        %v258 = vmul.f32 %v223, %v246
        %v259 = vmul.f32 %v228, %v234
        %v260 = vmul.f32 %v228, %v238
        %v261 = vmul.f32 %v228, %v242
        %v262 = vmul.f32 %v228, %v246
        %263 = vset.pattern.permute.xlu0 1
        %264 = vperm.xlu0 %263, %v212
        %v265 = vpop.permute.xlu0 %264
        %267 = vset.pattern.permute.xlu0 1
        %268 = vperm.xlu0 %267, %v213
        %v269 = vpop.permute.xlu0 %268
        %271 = vset.pattern.permute.xlu0 1
        %272 = vperm.xlu0 %271, %v214
        %v273 = vpop.permute.xlu0 %272
        %v275 = vadd.f32 %v251, %v265
        %v276 = vadd.f32 %v252, %v265
        %v277 = vadd.f32 %v253, %v265
        %v278 = vadd.f32 %v254, %v265
        %v279 = vadd.f32 %v255, %v269
        %v280 = vadd.f32 %v256, %v269
        %v281 = vadd.f32 %v257, %v269
        %v282 = vadd.f32 %v258, %v269
        %v283 = vadd.f32 %v259, %v273
        %v284 = vadd.f32 %v260, %v273
        %v285 = vadd.f32 %v261, %v273
        %v286 = vadd.f32 %v262, %v273
        %v287 = vtanh.pop %v275
        %v288 = vtanh.pop %v276
        %v289 = vtanh.pop %v277
        %v290 = vtanh.pop %v278
        %v291 = vtanh.pop %v279
        %v292 = vtanh.pop %v280
        %v293 = vtanh.pop %v281
        %v294 = vtanh.pop %v282
        %v295 = vtanh.pop %v283
        %v296 = vtanh.pop %v284
        %v297 = vtanh.pop %v285
        %v298 = vtanh.pop %v286
        %v299 = vld [vmem:[#allocation2] sm:$0xff]
        %v300 = vld [vmem:[#allocation2 + $0x8] sm:$0xff]
        %v301 = vld [vmem:[#allocation2 + $0x10] sm:$0xf]
        %302 = vset.pattern.permute.xlu0 2
        %303 = vperm.xlu0 %302, %v212
        %v304 = vpop.permute.xlu0 %303
        %306 = vset.pattern.permute.xlu0 2
        %307 = vperm.xlu0 %306, %v213
        %v308 = vpop.permute.xlu0 %307
        %310 = vset.pattern.permute.xlu0 2
        %311 = vperm.xlu0 %310, %v214
        %v312 = vpop.permute.xlu0 %311
        %vm314 = vcmask 162816
        %v316 = vsel %vm314, %v299, 0
        %v319 = vsel %vm314, %v300, 0
        %v322 = vsel %vm314, %v301, 0
        %vm324 = vcmask 1043456
        %v326 = vsel %vm324, %v295, 0
        %v329 = vsel %vm324, %v296, 0
        %v332 = vsel %vm324, %v297, 0
        %v335 = vsel %vm324, %v298, 0
        %337 = vmatprep.subr.mxu0 %v288
        %338 = vmatpush1.msra.mxu0 %v287
        %339 = vmatprep.subr.mxu0 %v292
        %340 = vmatpush1.msra.mxu0 %v291
        %341 = vmatprep.subr.mxu0 %v329
        %342 = vmatpush1.msra.mxu0 %v326
        %343 = vmatprep.subr.mxu0 0.0
        %344 = vmatpush1.msra.mxu0 0.0
        %345 = vmatprep.subr.mxu0 0.0
        %346 = vmatpush1.msra.mxu0 0.0
        %347 = vmatprep.subr.mxu0 0.0
        %348 = vmatpush1.msra.mxu0 0.0
        %349 = vmatprep.subr.mxu0 0.0
        %350 = vmatpush1.msra.mxu0 0.0
        %351 = vmatprep.subr.mxu0 0.0
        %352 = vmatpush1.msra.mxu0 0.0
        %353 = vmatprep.subr.mxu0 0.0
        %354 = vmatpush1.msra.mxu0 0.0
        %355 = vmatprep.subr.mxu0 0.0
        %356 = vmatpush1.msra.mxu0 0.0
        %357 = vmatprep.subr.mxu0 0.0
        %358 = vmatpush1.msra.mxu0 0.0
        %359 = vmatprep.subr.mxu0 0.0
        %360 = vmatpush1.msra.mxu0 0.0
        %361 = vmatprep.subr.mxu0 0.0
        %362 = vmatpush1.msra.mxu0 0.0
        %363 = vmatprep.subr.mxu0 0.0
        %364 = vmatpush1.msra.mxu0 0.0
        %365 = vmatprep.subr.mxu0 0.0
        %366 = vmatpush1.msra.mxu0 0.0
        %367 = vmatprep.subr.mxu0 0.0
        %368 = vmatpush1.msra.mxu0 0.0
        %369 = vmatprep.subr.mxu0 0.0
        %370 = vmatpush1.msra.mxu0 0.0
        %371 = vmatprep.subr.mxu0 0.0
        %372 = vmatpush1.msra.mxu0 0.0
        %373 = vmatprep.subr.mxu0 0.0
        %374 = vmatpush1.msra.mxu0 0.0
        %375 = vmatprep.subr.mxu0 0.0
        %376 = vmatpush1.msra.mxu0 0.0
        %377 = vmatprep.subr.mxu0 0.0
        %378 = vmatpush1.msra.mxu0 0.0
        %379 = vmatprep.subr.mxu0 0.0
        %380 = vmatpush1.msra.mxu0 0.0
        %381 = vmatprep.subr.mxu0 0.0
        %382 = vmatpush1.msra.mxu0 0.0
        %383 = vmatprep.subr.mxu0 0.0
        %384 = vmatpush1.msra.mxu0 0.0
        %385 = vmatprep.subr.mxu0 0.0
        %386 = vmatpush1.msra.mxu0 0.0
        %387 = vmatprep.subr.mxu0 0.0
        %388 = vmatpush1.msra.mxu0 0.0
        %389 = vmatprep.subr.mxu0 0.0
        %390 = vmatpush1.msra.mxu0 0.0
        %391 = vmatprep.subr.mxu0 0.0
        %392 = vmatpush1.msra.mxu0 0.0
        %393 = vmatprep.subr.mxu0 0.0
        %394 = vmatpush1.msra.mxu0 0.0
        %395 = vmatprep.subr.mxu0 0.0
        %396 = vmatpush1.msra.mxu0 0.0
        %397 = vmatprep.subr.mxu0 0.0
        %398 = vmatpush1.msra.mxu0 0.0
        %399 = vmatprep.subr.mxu0 0.0
        %400 = vmatpush1.msra.mxu0 0.0
        %401 = vmatprep.mubr.f32.mxu0 0.0
        %402 = vmatmul.mubr.f32.gmra.mrb[0].mxu0 %v316
        %v403 = vpop.f32.mrb[0].mxu0
        %v404 = vadd.f32 %v304, %v403
        %v405 = vpop.f32.mrb[0].mxu0
        %v406 = vadd.f32 %v304, %v405
        %407 = vmatprep.mubr.f32.mxu0 0.0
        %408 = vmatmul.mubr.f32.gmra.mrb[0].mxu0 %v319
        %v409 = vpop.f32.mrb[0].mxu0
        %v410 = vadd.f32 %v308, %v409
        %v411 = vpop.f32.mrb[0].mxu0
        %v412 = vadd.f32 %v308, %v411
        %413 = vmatprep.mubr.f32.mxu0 0.0
        %414 = vmatmul.mubr.f32.gmra.mrb[0].mxu0 %v322
        %v415 = vpop.f32.mrb[0].mxu0
        %v416 = vadd.f32 %v312, %v415
        %v417 = vpop.f32.mrb[0].mxu0
        %v418 = vadd.f32 %v312, %v417
        %419 = vdwg.mxu0
        %420 = vmatprep.subr.mxu0 %v290
        %421 = vmatpush1.msra.mxu0 %v289
        %422 = vmatprep.subr.mxu0 %v294
        %423 = vmatpush1.msra.mxu0 %v293
        %424 = vmatprep.subr.mxu0 %v335
        %425 = vmatpush1.msra.mxu0 %v332
        %426 = vmatprep.subr.mxu0 0.0
        %427 = vmatpush1.msra.mxu0 0.0
        %428 = vmatprep.subr.mxu0 0.0
        %429 = vmatpush1.msra.mxu0 0.0
        %430 = vmatprep.subr.mxu0 0.0
        %431 = vmatpush1.msra.mxu0 0.0
        %432 = vmatprep.subr.mxu0 0.0
        %433 = vmatpush1.msra.mxu0 0.0
        %434 = vmatprep.subr.mxu0 0.0
        %435 = vmatpush1.msra.mxu0 0.0
        %436 = vmatprep.subr.mxu0 0.0
        %437 = vmatpush1.msra.mxu0 0.0
        %438 = vmatprep.subr.mxu0 0.0
        %439 = vmatpush1.msra.mxu0 0.0
        %440 = vmatprep.subr.mxu0 0.0
        %441 = vmatpush1.msra.mxu0 0.0
        %442 = vmatprep.subr.mxu0 0.0
        %443 = vmatpush1.msra.mxu0 0.0
        %444 = vmatprep.subr.mxu0 0.0
        %445 = vmatpush1.msra.mxu0 0.0
        %446 = vmatprep.subr.mxu0 0.0
        %447 = vmatpush1.msra.mxu0 0.0
        %448 = vmatprep.subr.mxu0 0.0
        %449 = vmatpush1.msra.mxu0 0.0
        %450 = vmatprep.subr.mxu0 0.0
        %451 = vmatpush1.msra.mxu0 0.0
        %452 = vmatprep.subr.mxu0 0.0
        %453 = vmatpush1.msra.mxu0 0.0
        %454 = vmatprep.subr.mxu0 0.0
        %455 = vmatpush1.msra.mxu0 0.0
        %456 = vmatprep.subr.mxu0 0.0
        %457 = vmatpush1.msra.mxu0 0.0
        %458 = vmatprep.subr.mxu0 0.0
        %459 = vmatpush1.msra.mxu0 0.0
        %460 = vmatprep.subr.mxu0 0.0
        %461 = vmatpush1.msra.mxu0 0.0
        %462 = vmatprep.subr.mxu0 0.0
        %463 = vmatpush1.msra.mxu0 0.0
        %464 = vmatprep.subr.mxu0 0.0
        %465 = vmatpush1.msra.mxu0 0.0
        %466 = vmatprep.subr.mxu0 0.0
        %467 = vmatpush1.msra.mxu0 0.0
        %468 = vmatprep.subr.mxu0 0.0
        %469 = vmatpush1.msra.mxu0 0.0
        %470 = vmatprep.subr.mxu0 0.0
        %471 = vmatpush1.msra.mxu0 0.0
        %472 = vmatprep.subr.mxu0 0.0
        %473 = vmatpush1.msra.mxu0 0.0
        %474 = vmatprep.subr.mxu0 0.0
        %475 = vmatpush1.msra.mxu0 0.0
        %476 = vmatprep.subr.mxu0 0.0
        %477 = vmatpush1.msra.mxu0 0.0
        %478 = vmatprep.subr.mxu0 0.0
        %479 = vmatpush1.msra.mxu0 0.0
        %480 = vmatprep.subr.mxu0 0.0
        %481 = vmatpush1.msra.mxu0 0.0
        %482 = vmatprep.subr.mxu0 0.0
        %483 = vmatpush1.msra.mxu0 0.0
        %484 = vmatprep.mubr.f32.mxu0 0.0
        %485 = vmatmul.mubr.f32.gmra.mrb[0].mxu0 %v316
        %v486 = vpop.f32.mrb[0].mxu0
        %v487 = vadd.f32 %v304, %v486
        %v488 = vpop.f32.mrb[0].mxu0
        %v489 = vadd.f32 %v304, %v488
        %490 = vmatprep.mubr.f32.mxu0 0.0
        %491 = vmatmul.mubr.f32.gmra.mrb[0].mxu0 %v319
        %v492 = vpop.f32.mrb[0].mxu0
        %v493 = vadd.f32 %v308, %v492
        %v494 = vpop.f32.mrb[0].mxu0
        %v495 = vadd.f32 %v308, %v494
        %496 = vmatprep.mubr.f32.mxu0 0.0
        %497 = vmatmul.mubr.f32.gmra.mrb[0].mxu0 %v322
        %v498 = vpop.f32.mrb[0].mxu0
        %v499 = vadd.f32 %v312, %v498
        %v500 = vpop.f32.mrb[0].mxu0
        %v501 = vadd.f32 %v312, %v500
        %502 = vdwg.mxu0
        %v503 = vtanh.pop %v404
        %v504 = vtanh.pop %v406
        %v505 = vtanh.pop %v487
        %v506 = vtanh.pop %v489
        %v507 = vtanh.pop %v410
        %v508 = vtanh.pop %v412
        %v509 = vtanh.pop %v493
        %v510 = vtanh.pop %v495
        %v511 = vtanh.pop %v416
        %v512 = vtanh.pop %v418
        %v513 = vtanh.pop %v499
        %v514 = vtanh.pop %v501
        %s515 = scalar_lea.vmem [#allocation2], 24
        %v516 = vld [vmem:[%s515] sm:$0xff]
        %v517 = vld [vmem:[%s515 + $0x8] sm:$0xff]
        %v518 = vld [vmem:[%s515 + $0x10] sm:$0xf]
        %519 = vset.pattern.permute.xlu0 3
        %520 = vperm.xlu0 %519, %v212
        %v521 = vpop.permute.xlu0 %520
        %523 = vset.pattern.permute.xlu0 3
        %524 = vperm.xlu0 %523, %v213
        %v525 = vpop.permute.xlu0 %524
        %527 = vset.pattern.permute.xlu0 3
        %528 = vperm.xlu0 %527, %v214
        %v529 = vpop.permute.xlu0 %528
        %v532 = vsel %vm314, %v516, 0
        %v535 = vsel %vm314, %v517, 0
        %v538 = vsel %vm314, %v518, 0
        %v541 = vsel %vm324, %v511, 0
        %v544 = vsel %vm324, %v512, 0
        %v547 = vsel %vm324, %v513, 0
        %v550 = vsel %vm324, %v514, 0
        %552 = vmatprep.subr.mxu0 %v504
        %553 = vmatpush1.msra.mxu0 %v503
        %554 = vmatprep.subr.mxu0 %v508
        %555 = vmatpush1.msra.mxu0 %v507
        %556 = vmatprep.subr.mxu0 %v544
        %557 = vmatpush1.msra.mxu0 %v541
        %558 = vmatprep.subr.mxu0 0.0
        %559 = vmatpush1.msra.mxu0 0.0
        %560 = vmatprep.subr.mxu0 0.0
        %561 = vmatpush1.msra.mxu0 0.0
        %562 = vmatprep.subr.mxu0 0.0
        %563 = vmatpush1.msra.mxu0 0.0
        %564 = vmatprep.subr.mxu0 0.0
        %565 = vmatpush1.msra.mxu0 0.0
        %566 = vmatprep.subr.mxu0 0.0
        %567 = vmatpush1.msra.mxu0 0.0
        %568 = vmatprep.subr.mxu0 0.0
        %569 = vmatpush1.msra.mxu0 0.0
        %570 = vmatprep.subr.mxu0 0.0
        %571 = vmatpush1.msra.mxu0 0.0
        %572 = vmatprep.subr.mxu0 0.0
        %573 = vmatpush1.msra.mxu0 0.0
        %574 = vmatprep.subr.mxu0 0.0
        %575 = vmatpush1.msra.mxu0 0.0
        %576 = vmatprep.subr.mxu0 0.0
        %577 = vmatpush1.msra.mxu0 0.0
        %578 = vmatprep.subr.mxu0 0.0
        %579 = vmatpush1.msra.mxu0 0.0
        %580 = vmatprep.subr.mxu0 0.0
        %581 = vmatpush1.msra.mxu0 0.0
        %582 = vmatprep.subr.mxu0 0.0
        %583 = vmatpush1.msra.mxu0 0.0
        %584 = vmatprep.subr.mxu0 0.0
        %585 = vmatpush1.msra.mxu0 0.0
        %586 = vmatprep.subr.mxu0 0.0
        %587 = vmatpush1.msra.mxu0 0.0
        %588 = vmatprep.subr.mxu0 0.0
        %589 = vmatpush1.msra.mxu0 0.0
        %590 = vmatprep.subr.mxu0 0.0
        %591 = vmatpush1.msra.mxu0 0.0
        %592 = vmatprep.subr.mxu0 0.0
        %593 = vmatpush1.msra.mxu0 0.0
        %594 = vmatprep.subr.mxu0 0.0
        %595 = vmatpush1.msra.mxu0 0.0
        %596 = vmatprep.subr.mxu0 0.0
        %597 = vmatpush1.msra.mxu0 0.0
        %598 = vmatprep.subr.mxu0 0.0
        %599 = vmatpush1.msra.mxu0 0.0
        %600 = vmatprep.subr.mxu0 0.0
        %601 = vmatpush1.msra.mxu0 0.0
        %602 = vmatprep.subr.mxu0 0.0
        %603 = vmatpush1.msra.mxu0 0.0
        %604 = vmatprep.subr.mxu0 0.0
        %605 = vmatpush1.msra.mxu0 0.0
        %606 = vmatprep.subr.mxu0 0.0
        %607 = vmatpush1.msra.mxu0 0.0
        %608 = vmatprep.subr.mxu0 0.0
        %609 = vmatpush1.msra.mxu0 0.0
        %610 = vmatprep.subr.mxu0 0.0
        %611 = vmatpush1.msra.mxu0 0.0
        %612 = vmatprep.subr.mxu0 0.0
        %613 = vmatpush1.msra.mxu0 0.0
        %614 = vmatprep.subr.mxu0 0.0
        %615 = vmatpush1.msra.mxu0 0.0
        %616 = vmatprep.mubr.f32.mxu0 0.0
        %617 = vmatmul.mubr.f32.gmra.mrb[0].mxu0 %v532
        %v618 = vpop.f32.mrb[0].mxu0
        %v619 = vadd.f32 %v521, %v618
        %v620 = vpop.f32.mrb[0].mxu0
        %v621 = vadd.f32 %v521, %v620
        %622 = vmatprep.mubr.f32.mxu0 0.0
        %623 = vmatmul.mubr.f32.gmra.mrb[0].mxu0 %v535
        %v624 = vpop.f32.mrb[0].mxu0
        %v625 = vadd.f32 %v525, %v624
        %v626 = vpop.f32.mrb[0].mxu0
        %v627 = vadd.f32 %v525, %v626
        %628 = vmatprep.mubr.f32.mxu0 0.0
        %629 = vmatmul.mubr.f32.gmra.mrb[0].mxu0 %v538
        %v630 = vpop.f32.mrb[0].mxu0
        %v631 = vadd.f32 %v529, %v630
        %v632 = vpop.f32.mrb[0].mxu0
        %v633 = vadd.f32 %v529, %v632
        %634 = vdwg.mxu0
        %635 = vmatprep.subr.mxu0 %v506
        %636 = vmatpush1.msra.mxu0 %v505
        %637 = vmatprep.subr.mxu0 %v510
        %638 = vmatpush1.msra.mxu0 %v509
        %639 = vmatprep.subr.mxu0 %v550
        %640 = vmatpush1.msra.mxu0 %v547
        %641 = vmatprep.subr.mxu0 0.0
        %642 = vmatpush1.msra.mxu0 0.0
        %643 = vmatprep.subr.mxu0 0.0
        %644 = vmatpush1.msra.mxu0 0.0
        %645 = vmatprep.subr.mxu0 0.0
        %646 = vmatpush1.msra.mxu0 0.0
        %647 = vmatprep.subr.mxu0 0.0
        %648 = vmatpush1.msra.mxu0 0.0
        %649 = vmatprep.subr.mxu0 0.0
        %650 = vmatpush1.msra.mxu0 0.0
        %651 = vmatprep.subr.mxu0 0.0
        %652 = vmatpush1.msra.mxu0 0.0
        %653 = vmatprep.subr.mxu0 0.0
        %654 = vmatpush1.msra.mxu0 0.0
        %655 = vmatprep.subr.mxu0 0.0
        %656 = vmatpush1.msra.mxu0 0.0
        %657 = vmatprep.subr.mxu0 0.0
        %658 = vmatpush1.msra.mxu0 0.0
        %659 = vmatprep.subr.mxu0 0.0
        %660 = vmatpush1.msra.mxu0 0.0
        %661 = vmatprep.subr.mxu0 0.0
        %662 = vmatpush1.msra.mxu0 0.0
        %663 = vmatprep.subr.mxu0 0.0
        %664 = vmatpush1.msra.mxu0 0.0
        %665 = vmatprep.subr.mxu0 0.0
        %666 = vmatpush1.msra.mxu0 0.0
        %667 = vmatprep.subr.mxu0 0.0
        %668 = vmatpush1.msra.mxu0 0.0
        %669 = vmatprep.subr.mxu0 0.0
        %670 = vmatpush1.msra.mxu0 0.0
        %671 = vmatprep.subr.mxu0 0.0
        %672 = vmatpush1.msra.mxu0 0.0
        %673 = vmatprep.subr.mxu0 0.0
        %674 = vmatpush1.msra.mxu0 0.0
        %675 = vmatprep.subr.mxu0 0.0
        %676 = vmatpush1.msra.mxu0 0.0
        %677 = vmatprep.subr.mxu0 0.0
        %678 = vmatpush1.msra.mxu0 0.0
        %679 = vmatprep.subr.mxu0 0.0
        %680 = vmatpush1.msra.mxu0 0.0
        %681 = vmatprep.subr.mxu0 0.0
        %682 = vmatpush1.msra.mxu0 0.0
        %683 = vmatprep.subr.mxu0 0.0
        %684 = vmatpush1.msra.mxu0 0.0
        %685 = vmatprep.subr.mxu0 0.0
        %686 = vmatpush1.msra.mxu0 0.0
        %687 = vmatprep.subr.mxu0 0.0
        %688 = vmatpush1.msra.mxu0 0.0
        %689 = vmatprep.subr.mxu0 0.0
        %690 = vmatpush1.msra.mxu0 0.0
        %691 = vmatprep.subr.mxu0 0.0
        %692 = vmatpush1.msra.mxu0 0.0
        %693 = vmatprep.subr.mxu0 0.0
        %694 = vmatpush1.msra.mxu0 0.0
        %695 = vmatprep.subr.mxu0 0.0
        %696 = vmatpush1.msra.mxu0 0.0
        %697 = vmatprep.subr.mxu0 0.0
        %698 = vmatpush1.msra.mxu0 0.0
        %699 = vmatprep.mubr.f32.mxu0 0.0
        %700 = vmatmul.mubr.f32.gmra.mrb[0].mxu0 %v532
        %v701 = vpop.f32.mrb[0].mxu0
        %v702 = vadd.f32 %v521, %v701
        %v703 = vpop.f32.mrb[0].mxu0
        %v704 = vadd.f32 %v521, %v703
        %705 = vmatprep.mubr.f32.mxu0 0.0
        %706 = vmatmul.mubr.f32.gmra.mrb[0].mxu0 %v535
        %v707 = vpop.f32.mrb[0].mxu0
        %v708 = vadd.f32 %v525, %v707
        %v709 = vpop.f32.mrb[0].mxu0
        %v710 = vadd.f32 %v525, %v709
        %711 = vmatprep.mubr.f32.mxu0 0.0
        %712 = vmatmul.mubr.f32.gmra.mrb[0].mxu0 %v538
        %v713 = vpop.f32.mrb[0].mxu0
        %v714 = vadd.f32 %v529, %v713
        %v715 = vpop.f32.mrb[0].mxu0
        %v716 = vadd.f32 %v529, %v715
        %717 = vdwg.mxu0
        %v718 = vtanh.pop %v619
        %v719 = vtanh.pop %v621
        %v720 = vtanh.pop %v702
        %v721 = vtanh.pop %v704
        %v722 = vtanh.pop %v625
        %v723 = vtanh.pop %v627
        %v724 = vtanh.pop %v708
        %v725 = vtanh.pop %v710
        %v726 = vtanh.pop %v631
        %v727 = vtanh.pop %v633
        %v728 = vtanh.pop %v714
        %v729 = vtanh.pop %v716
        %s730 = scalar_lea.vmem [#allocation2], 48
        %v731 = vld [vmem:[%s730] sm:$0xff]
        %v732 = vld [vmem:[%s730 + $0x8] sm:$0xff]
        %v733 = vld [vmem:[%s730 + $0x10] sm:$0xf]
        %734 = vset.pattern.permute.xlu0 4
        %735 = vperm.xlu0 %734, %v212
        %v736 = vpop.permute.xlu0 %735
        %738 = vset.pattern.permute.xlu0 4
        %739 = vperm.xlu0 %738, %v213
        %v740 = vpop.permute.xlu0 %739
        %742 = vset.pattern.permute.xlu0 4
        %743 = vperm.xlu0 %742, %v214
        %v744 = vpop.permute.xlu0 %743
        %v747 = vsel %vm314, %v731, 0
        %v750 = vsel %vm314, %v732, 0
        %v753 = vsel %vm314, %v733, 0
        %v756 = vsel %vm324, %v726, 0
        %v759 = vsel %vm324, %v727, 0
        %v762 = vsel %vm324, %v728, 0
        %v765 = vsel %vm324, %v729, 0
        %767 = vmatprep.subr.mxu0 %v719
        %768 = vmatpush1.msra.mxu0 %v718
        %769 = vmatprep.subr.mxu0 %v723
        %770 = vmatpush1.msra.mxu0 %v722
        %771 = vmatprep.subr.mxu0 %v759
        %772 = vmatpush1.msra.mxu0 %v756
        %773 = vmatprep.subr.mxu0 0.0
        %774 = vmatpush1.msra.mxu0 0.0
        %775 = vmatprep.subr.mxu0 0.0
        %776 = vmatpush1.msra.mxu0 0.0
        %777 = vmatprep.subr.mxu0 0.0
        %778 = vmatpush1.msra.mxu0 0.0
        %779 = vmatprep.subr.mxu0 0.0
        %780 = vmatpush1.msra.mxu0 0.0
        %781 = vmatprep.subr.mxu0 0.0
        %782 = vmatpush1.msra.mxu0 0.0
        %783 = vmatprep.subr.mxu0 0.0
        %784 = vmatpush1.msra.mxu0 0.0
        %785 = vmatprep.subr.mxu0 0.0
        %786 = vmatpush1.msra.mxu0 0.0
        %787 = vmatprep.subr.mxu0 0.0
        %788 = vmatpush1.msra.mxu0 0.0
        %789 = vmatprep.subr.mxu0 0.0
        %790 = vmatpush1.msra.mxu0 0.0
        %791 = vmatprep.subr.mxu0 0.0
        %792 = vmatpush1.msra.mxu0 0.0
        %793 = vmatprep.subr.mxu0 0.0
        %794 = vmatpush1.msra.mxu0 0.0
        %795 = vmatprep.subr.mxu0 0.0
        %796 = vmatpush1.msra.mxu0 0.0
        %797 = vmatprep.subr.mxu0 0.0
        %798 = vmatpush1.msra.mxu0 0.0
        %799 = vmatprep.subr.mxu0 0.0
        %800 = vmatpush1.msra.mxu0 0.0
        %801 = vmatprep.subr.mxu0 0.0
        %802 = vmatpush1.msra.mxu0 0.0
        %803 = vmatprep.subr.mxu0 0.0
        %804 = vmatpush1.msra.mxu0 0.0
        %805 = vmatprep.subr.mxu0 0.0
        %806 = vmatpush1.msra.mxu0 0.0
        %807 = vmatprep.subr.mxu0 0.0
        %808 = vmatpush1.msra.mxu0 0.0
        %809 = vmatprep.subr.mxu0 0.0
        %810 = vmatpush1.msra.mxu0 0.0
        %811 = vmatprep.subr.mxu0 0.0
        %812 = vmatpush1.msra.mxu0 0.0
        %813 = vmatprep.subr.mxu0 0.0
        %814 = vmatpush1.msra.mxu0 0.0
        %815 = vmatprep.subr.mxu0 0.0
        %816 = vmatpush1.msra.mxu0 0.0
        %817 = vmatprep.subr.mxu0 0.0
        %818 = vmatpush1.msra.mxu0 0.0
        %819 = vmatprep.subr.mxu0 0.0
        %820 = vmatpush1.msra.mxu0 0.0
        %821 = vmatprep.subr.mxu0 0.0
        %822 = vmatpush1.msra.mxu0 0.0
        %823 = vmatprep.subr.mxu0 0.0
        %824 = vmatpush1.msra.mxu0 0.0
        %825 = vmatprep.subr.mxu0 0.0
        %826 = vmatpush1.msra.mxu0 0.0
        %827 = vmatprep.subr.mxu0 0.0
        %828 = vmatpush1.msra.mxu0 0.0
        %829 = vmatprep.subr.mxu0 0.0
        %830 = vmatpush1.msra.mxu0 0.0
        %831 = vmatprep.mubr.f32.mxu0 0.0
        %832 = vmatmul.mubr.f32.gmra.mrb[0].mxu0 %v747
        %v833 = vpop.f32.mrb[0].mxu0
        %v834 = vadd.f32 %v736, %v833
        %v835 = vpop.f32.mrb[0].mxu0
        %v836 = vadd.f32 %v736, %v835
        %837 = vmatprep.mubr.f32.mxu0 0.0
        %838 = vmatmul.mubr.f32.gmra.mrb[0].mxu0 %v750
        %v839 = vpop.f32.mrb[0].mxu0
        %v840 = vadd.f32 %v740, %v839
        %v841 = vpop.f32.mrb[0].mxu0
        %v842 = vadd.f32 %v740, %v841
        %843 = vmatprep.mubr.f32.mxu0 0.0
        %844 = vmatmul.mubr.f32.gmra.mrb[0].mxu0 %v753
        %v845 = vpop.f32.mrb[0].mxu0
        %v846 = vadd.f32 %v744, %v845
        %v847 = vpop.f32.mrb[0].mxu0
        %v848 = vadd.f32 %v744, %v847
        %849 = vdwg.mxu0
        %850 = vmatprep.subr.mxu0 %v721
        %851 = vmatpush1.msra.mxu0 %v720
        %852 = vmatprep.subr.mxu0 %v725
        %853 = vmatpush1.msra.mxu0 %v724
        %854 = vmatprep.subr.mxu0 %v765
        %855 = vmatpush1.msra.mxu0 %v762
        %856 = vmatprep.subr.mxu0 0.0
        %857 = vmatpush1.msra.mxu0 0.0
        %858 = vmatprep.subr.mxu0 0.0
        %859 = vmatpush1.msra.mxu0 0.0
        %860 = vmatprep.subr.mxu0 0.0
        %861 = vmatpush1.msra.mxu0 0.0
        %862 = vmatprep.subr.mxu0 0.0
        %863 = vmatpush1.msra.mxu0 0.0
        %864 = vmatprep.subr.mxu0 0.0
        %865 = vmatpush1.msra.mxu0 0.0
        %866 = vmatprep.subr.mxu0 0.0
        %867 = vmatpush1.msra.mxu0 0.0
        %868 = vmatprep.subr.mxu0 0.0
        %869 = vmatpush1.msra.mxu0 0.0
        %870 = vmatprep.subr.mxu0 0.0
        %871 = vmatpush1.msra.mxu0 0.0
        %872 = vmatprep.subr.mxu0 0.0
        %873 = vmatpush1.msra.mxu0 0.0
        %874 = vmatprep.subr.mxu0 0.0
        %875 = vmatpush1.msra.mxu0 0.0
        %876 = vmatprep.subr.mxu0 0.0
        %877 = vmatpush1.msra.mxu0 0.0
        %878 = vmatprep.subr.mxu0 0.0
        %879 = vmatpush1.msra.mxu0 0.0
        %880 = vmatprep.subr.mxu0 0.0
        %881 = vmatpush1.msra.mxu0 0.0
        %882 = vmatprep.subr.mxu0 0.0
        %883 = vmatpush1.msra.mxu0 0.0
        %884 = vmatprep.subr.mxu0 0.0
        %885 = vmatpush1.msra.mxu0 0.0
        %886 = vmatprep.subr.mxu0 0.0
        %887 = vmatpush1.msra.mxu0 0.0
        %888 = vmatprep.subr.mxu0 0.0
        %889 = vmatpush1.msra.mxu0 0.0
        %890 = vmatprep.subr.mxu0 0.0
        %891 = vmatpush1.msra.mxu0 0.0
        %892 = vmatprep.subr.mxu0 0.0
        %893 = vmatpush1.msra.mxu0 0.0
        %894 = vmatprep.subr.mxu0 0.0
        %895 = vmatpush1.msra.mxu0 0.0
        %896 = vmatprep.subr.mxu0 0.0
        %897 = vmatpush1.msra.mxu0 0.0
        %898 = vmatprep.subr.mxu0 0.0
        %899 = vmatpush1.msra.mxu0 0.0
        %900 = vmatprep.subr.mxu0 0.0
        %901 = vmatpush1.msra.mxu0 0.0
        %902 = vmatprep.subr.mxu0 0.0
        %903 = vmatpush1.msra.mxu0 0.0
        %904 = vmatprep.subr.mxu0 0.0
        %905 = vmatpush1.msra.mxu0 0.0
        %906 = vmatprep.subr.mxu0 0.0
        %907 = vmatpush1.msra.mxu0 0.0
        %908 = vmatprep.subr.mxu0 0.0
        %909 = vmatpush1.msra.mxu0 0.0
        %910 = vmatprep.subr.mxu0 0.0
        %911 = vmatpush1.msra.mxu0 0.0
        %912 = vmatprep.subr.mxu0 0.0
        %913 = vmatpush1.msra.mxu0 0.0
        %914 = vmatprep.mubr.f32.mxu0 0.0
        %915 = vmatmul.mubr.f32.gmra.mrb[0].mxu0 %v747
        %v916 = vpop.f32.mrb[0].mxu0
        %v917 = vadd.f32 %v736, %v916
        %v918 = vpop.f32.mrb[0].mxu0
        %v919 = vadd.f32 %v736, %v918
        %920 = vmatprep.mubr.f32.mxu0 0.0
        %921 = vmatmul.mubr.f32.gmra.mrb[0].mxu0 %v750
        %v922 = vpop.f32.mrb[0].mxu0
        %v923 = vadd.f32 %v740, %v922
        %v924 = vpop.f32.mrb[0].mxu0
        %v925 = vadd.f32 %v740, %v924
        %926 = vmatprep.mubr.f32.mxu0 0.0
        %927 = vmatmul.mubr.f32.gmra.mrb[0].mxu0 %v753
        %v928 = vpop.f32.mrb[0].mxu0
        %v929 = vadd.f32 %v744, %v928
        %v930 = vpop.f32.mrb[0].mxu0
        %v931 = vadd.f32 %v744, %v930
        %932 = vdwg.mxu0
        %v933 = vtanh.pop %v834
        %v934 = vtanh.pop %v836
        %v935 = vtanh.pop %v917
        %v936 = vtanh.pop %v919
        %v937 = vtanh.pop %v840
        %v938 = vtanh.pop %v842
        %v939 = vtanh.pop %v923
        %v940 = vtanh.pop %v925
        %v941 = vtanh.pop %v846
        %v942 = vtanh.pop %v848
        %v943 = vtanh.pop %v929
        %v944 = vtanh.pop %v931
        %v945 = vld [vmem:[%s3] sm:$0x1f]
        %946 = vset.pattern.permute.xlu0 5
        %947 = vperm.xlu0 %946, %v212
        %v948 = vpop.permute.xlu0 %947
        %v951 = vsel %vm314, %v945, 0
        %v954 = vsel %vm324, %v941, 0
        %v957 = vsel %vm324, %v942, 0
        %v960 = vsel %vm324, %v943, 0
        %v963 = vsel %vm324, %v944, 0
        %965 = vmatprep.subr.mxu0 %v934
        %966 = vmatpush1.msra.mxu0 %v933
        %967 = vmatprep.subr.mxu0 %v938
        %968 = vmatpush1.msra.mxu0 %v937
        %969 = vmatprep.subr.mxu0 %v957
        %970 = vmatpush1.msra.mxu0 %v954
        %971 = vmatprep.subr.mxu0 0.0
        %972 = vmatpush1.msra.mxu0 0.0
        %973 = vmatprep.subr.mxu0 0.0
        %974 = vmatpush1.msra.mxu0 0.0
        %975 = vmatprep.subr.mxu0 0.0
        %976 = vmatpush1.msra.mxu0 0.0
        %977 = vmatprep.subr.mxu0 0.0
        %978 = vmatpush1.msra.mxu0 0.0
        %979 = vmatprep.subr.mxu0 0.0
        %980 = vmatpush1.msra.mxu0 0.0
        %981 = vmatprep.subr.mxu0 0.0
        %982 = vmatpush1.msra.mxu0 0.0
        %983 = vmatprep.subr.mxu0 0.0
        %984 = vmatpush1.msra.mxu0 0.0
        %985 = vmatprep.subr.mxu0 0.0
        %986 = vmatpush1.msra.mxu0 0.0
        %987 = vmatprep.subr.mxu0 0.0
        %988 = vmatpush1.msra.mxu0 0.0
        %989 = vmatprep.subr.mxu0 0.0
        %990 = vmatpush1.msra.mxu0 0.0
        %991 = vmatprep.subr.mxu0 0.0
        %992 = vmatpush1.msra.mxu0 0.0
        %993 = vmatprep.subr.mxu0 0.0
        %994 = vmatpush1.msra.mxu0 0.0
        %995 = vmatprep.subr.mxu0 0.0
        %996 = vmatpush1.msra.mxu0 0.0
        %997 = vmatprep.subr.mxu0 0.0
        %998 = vmatpush1.msra.mxu0 0.0
        %999 = vmatprep.subr.mxu0 0.0
        %1000 = vmatpush1.msra.mxu0 0.0
        %1001 = vmatprep.subr.mxu0 0.0
        %1002 = vmatpush1.msra.mxu0 0.0
        %1003 = vmatprep.subr.mxu0 0.0
        %1004 = vmatpush1.msra.mxu0 0.0
        %1005 = vmatprep.subr.mxu0 0.0
        %1006 = vmatpush1.msra.mxu0 0.0
        %1007 = vmatprep.subr.mxu0 0.0
        %1008 = vmatpush1.msra.mxu0 0.0
        %1009 = vmatprep.subr.mxu0 0.0
        %1010 = vmatpush1.msra.mxu0 0.0
        %1011 = vmatprep.subr.mxu0 0.0
        %1012 = vmatpush1.msra.mxu0 0.0
        %1013 = vmatprep.subr.mxu0 0.0
        %1014 = vmatpush1.msra.mxu0 0.0
        %1015 = vmatprep.subr.mxu0 0.0
        %1016 = vmatpush1.msra.mxu0 0.0
        %1017 = vmatprep.subr.mxu0 0.0
        %1018 = vmatpush1.msra.mxu0 0.0
        %1019 = vmatprep.subr.mxu0 0.0
        %1020 = vmatpush1.msra.mxu0 0.0
        %1021 = vmatprep.subr.mxu0 0.0
        %1022 = vmatpush1.msra.mxu0 0.0
        %1023 = vmatprep.subr.mxu0 0.0
        %1024 = vmatpush1.msra.mxu0 0.0
        %1025 = vmatprep.subr.mxu0 0.0
        %1026 = vmatpush1.msra.mxu0 0.0
        %1027 = vmatprep.subr.mxu0 0.0
        %1028 = vmatpush1.msra.mxu0 0.0
        %1029 = vmatprep.mubr.f32.mxu0 0.0
        %1030 = vmatmul.mubr.f32.gmra.mrb[0].mxu0 %v951
        %v1031 = vpop.f32.mrb[0].mxu0
        %v1032 = vadd.f32 %v948, %v1031
        %v1033 = vpop.f32.mrb[0].mxu0
        %v1034 = vadd.f32 %v948, %v1033
        %1035 = vdwg.mxu0
        %1036 = vmatprep.subr.mxu0 %v936
        %1037 = vmatpush1.msra.mxu0 %v935
        %1038 = vmatprep.subr.mxu0 %v940
        %1039 = vmatpush1.msra.mxu0 %v939
        %1040 = vmatprep.subr.mxu0 %v963
        %1041 = vmatpush1.msra.mxu0 %v960
        %1042 = vmatprep.subr.mxu0 0.0
        %1043 = vmatpush1.msra.mxu0 0.0
        %1044 = vmatprep.subr.mxu0 0.0
        %1045 = vmatpush1.msra.mxu0 0.0
        %1046 = vmatprep.subr.mxu0 0.0
        %1047 = vmatpush1.msra.mxu0 0.0
        %1048 = vmatprep.subr.mxu0 0.0
        %1049 = vmatpush1.msra.mxu0 0.0
        %1050 = vmatprep.subr.mxu0 0.0
        %1051 = vmatpush1.msra.mxu0 0.0
        %1052 = vmatprep.subr.mxu0 0.0
        %1053 = vmatpush1.msra.mxu0 0.0
        %1054 = vmatprep.subr.mxu0 0.0
        %1055 = vmatpush1.msra.mxu0 0.0
        %1056 = vmatprep.subr.mxu0 0.0
        %1057 = vmatpush1.msra.mxu0 0.0
        %1058 = vmatprep.subr.mxu0 0.0
        %1059 = vmatpush1.msra.mxu0 0.0
        %1060 = vmatprep.subr.mxu0 0.0
        %1061 = vmatpush1.msra.mxu0 0.0
        %1062 = vmatprep.subr.mxu0 0.0
        %1063 = vmatpush1.msra.mxu0 0.0
        %1064 = vmatprep.subr.mxu0 0.0
        %1065 = vmatpush1.msra.mxu0 0.0
        %1066 = vmatprep.subr.mxu0 0.0
        %1067 = vmatpush1.msra.mxu0 0.0
        %1068 = vmatprep.subr.mxu0 0.0
        %1069 = vmatpush1.msra.mxu0 0.0
        %1070 = vmatprep.subr.mxu0 0.0
        %1071 = vmatpush1.msra.mxu0 0.0
        %1072 = vmatprep.subr.mxu0 0.0
        %1073 = vmatpush1.msra.mxu0 0.0
        %1074 = vmatprep.subr.mxu0 0.0
        %1075 = vmatpush1.msra.mxu0 0.0
        %1076 = vmatprep.subr.mxu0 0.0
        %1077 = vmatpush1.msra.mxu0 0.0
        %1078 = vmatprep.subr.mxu0 0.0
        %1079 = vmatpush1.msra.mxu0 0.0
        %1080 = vmatprep.subr.mxu0 0.0
        %1081 = vmatpush1.msra.mxu0 0.0
        %1082 = vmatprep.subr.mxu0 0.0
        %1083 = vmatpush1.msra.mxu0 0.0
        %1084 = vmatprep.subr.mxu0 0.0
        %1085 = vmatpush1.msra.mxu0 0.0
        %1086 = vmatprep.subr.mxu0 0.0
        %1087 = vmatpush1.msra.mxu0 0.0
        %1088 = vmatprep.subr.mxu0 0.0
        %1089 = vmatpush1.msra.mxu0 0.0
        %1090 = vmatprep.subr.mxu0 0.0
        %1091 = vmatpush1.msra.mxu0 0.0
        %1092 = vmatprep.subr.mxu0 0.0
        %1093 = vmatpush1.msra.mxu0 0.0
        %1094 = vmatprep.subr.mxu0 0.0
        %1095 = vmatpush1.msra.mxu0 0.0
        %1096 = vmatprep.subr.mxu0 0.0
        %1097 = vmatpush1.msra.mxu0 0.0
        %1098 = vmatprep.subr.mxu0 0.0
        %1099 = vmatpush1.msra.mxu0 0.0
        %1100 = vmatprep.mubr.f32.mxu0 0.0
        %1101 = vmatmul.mubr.f32.gmra.mrb[0].mxu0 %v951
        %v1102 = vpop.f32.mrb[0].mxu0
        %v1103 = vadd.f32 %v948, %v1102
        %v1104 = vpop.f32.mrb[0].mxu0
        %v1105 = vadd.f32 %v948, %v1104
        %1106 = vdwg.mxu0
        %1107 = vst [vmem:[%s204] sm:$0x1f] %v1032
        %1108 = vst [vmem:[%s204 + $0x8] sm:$0x1f] %v1034
        %1109 = vst [vmem:[%s204 + $0x10] sm:$0x1f] %v1103
        %1110 = vst [vmem:[%s204 + $0x18] sm:$0x1f] %v1105
        %s1111 = sand.u32 %s116, 1
        %s1112 = scalar_lea.sflag [#allocation4], %s1111
        %s1113 = sand.u32 %s116, 1
        %s1114 = smul.addr %s1113, 32
        %s1115 = scalar_lea.vmem [#allocation5], %s1114
        // Predicated region
        $region41: #{tpu_custom_call.1} parent=35 // pred_check
          %p1116 = pneg %p126
        $region42: #{tpu_custom_call.1} parent=35 // pred_check_branch
          %1118 = sbr.rel (%p1116) target = $region44
        $region43: #{tpu_custom_call.1} parent=35 // pred_region
          %s1119 = smul.u32 4, %s19
          %s1121 = ssub.s32 512, 512
          %1122 = vsyncadd %s1112, %s1121
          %s1123 = smul.addr %s1119, 128
          %s1124 = scalar_lea.hbm %s4, %s1123
          %s1126 = sshll.u32 %s1115, 4
          %s1127 = int_to_ptr.vmem [resolvable:$true] %s1126
          %1129 = dma.vmem_to_hbm [thread:$0]  %s1127, 512, %s1124, %s1112
        $region44: #{tpu_custom_call.1} parent=35 // pred_fallthru
          _
      $region36: #{tpu_custom_call.1} parent=5 // pred_fallthru
        _
      %p1130 = scmp.le.s32.totalorder 2, %s14
      // Predicated region
      $region45: #{tpu_custom_call.1} parent=5 // pred_check
        %p1131 = pneg %p1130
      $region46: #{tpu_custom_call.1} parent=5 // pred_check_branch
        %1133 = sbr.rel (%p1131) target = $region48
      $region47: #{tpu_custom_call.1} parent=5 // pred_region
        %s1134 = ssub.s32 %s14, 2
        // Predicated region
        $region49: #{tpu_custom_call.1} parent=47 // pred_check
          %p1135 = pneg %p132
        $region50: #{tpu_custom_call.1} parent=47 // pred_check_branch
          %1137 = sbr.rel (%p1135) target = $region52
        $region51: #{tpu_custom_call.1} parent=47 // pred_region
          %s1138 = sand.u32 %s117, 1
          %s1139 = scalar_lea.sflag [#allocation4], %s1138
          %s1140 = sand.u32 %s117, 1
          %s1141 = smul.addr %s1140, 32
          %s1142 = scalar_lea.vmem [#allocation5], %s1141
          %1143 = dma.done %s1139, 512
        $region52: #{tpu_custom_call.1} parent=47 // pred_fallthru
          _
      $region48: #{tpu_custom_call.1} parent=5 // pred_fallthru
        _
    $region6: #{tpu_custom_call.1} parent=1 // loop_footer
      %s18 = sadd.s32 1, %s14
    $region7: #{tpu_custom_call.1} parent=1 // loop_footer_branch
      %13 = sbr.rel target = $region3
    $region8: #{tpu_custom_call.1} parent=1 // loop_exit
      _
    %1144 = vsyncpa [#allocation3], 1
    %s1145 = scalar_lea.sflag [#allocation3], 1
    %1146 = vsyncpa %s1145, 1
    %1147 = vsyncpa [#allocation4], 1
    %s1148 = scalar_lea.sflag [#allocation4], 1
    %1149 = vsyncpa %s1148, 1

</llo_original>
